<compile_context>
chip_gen: v7x
topology: tpu7x:2x2x1
jax: 0.10.0
libtpu: 0.0.40
codegen_flags: <defaults>
</compile_context>

<pallas_src>
import functools
import math

import jax
import jax.numpy as jnp
from jax.experimental import pallas as pl
from jax.experimental.pallas import tpu as pltpu


def _round_up(x: int, m: int) -> int:
    return -(-x // m) * m


def make_fixed_embedding_table(c_in: int, d_model: int) -> jnp.ndarray:
    """Deterministic sinusoidal table matching the PyTorch __init__ (even d_model)."""
    assert d_model % 2 == 0, "FixedEmbedding requires an even d_model"
    position = jnp.arange(0, c_in, dtype=jnp.float32)[:, None]            # (c_in, 1)
    div_term = jnp.exp(jnp.arange(0, d_model, 2, dtype=jnp.float32)
                       * -(math.log(10000.0) / d_model))                  # (d_model/2,)
    w = jnp.zeros((c_in, d_model), dtype=jnp.float32)
    w = w.at[:, 0::2].set(jnp.sin(position * div_term))
    w = w.at[:, 1::2].set(jnp.cos(position * div_term))
    return w


def _fixed_embedding_kernel(idx_ref, e_ref, kiota_ref, wbd_ref, out_ref,
                            *, c_in: int, p_pack: int):
    # idx_ref   : (TB, P)  int32   -- P tokens packed per output row
    # e_ref     : (P, K)   float32 -- lane-group expander, K = P * c_in
    # kiota_ref : (1, K)   float32 -- per-lane row id (j % c_in)
    # wbd_ref   : (K, D)   float32 -- block-diagonal packed table (VMEM resident)
    # out_ref   : (TB, D)  float32 -- lane-dense output block
    idx = jnp.clip(idx_ref[...], 0, c_in - 1).astype(jnp.float32)        # (TB, P)
    if p_pack == 1:
        idx_exp = idx                                                     # (TB, 1) broadcasts
    else:
        # Expand token ids across their c_in-wide lane group (idle MXU, exact in f32).
        idx_exp = jnp.dot(idx, e_ref[...],
                          preferred_element_type=jnp.float32)             # (TB, K)
    onehot = (idx_exp == kiota_ref[...]).astype(jnp.float32)              # (TB, K)
    # Packed one-hot gather on the MXU: each output row picks exactly one table row
    # per d_model-wide lane group.
    out_ref[...] = jnp.dot(onehot, wbd_ref[...],
                           preferred_element_type=jnp.float32)            # (TB, D)


def fixed_embedding(x: jnp.ndarray, w: jnp.ndarray, *,
                    rows_per_tile: int = 2048,
                    small_t_threshold: int = 4096,
                    force_kernel: bool = False) -> jnp.ndarray:
    """x: (B, L) integer indices, w: (c_in, d_model) table -> (B, L, d_model) f32."""
    B, L = x.shape
    c_in, d_model = w.shape
    T = B * L

    # Small-T fast path: for the typical temporal vocab use (a few hundred tokens)
    # a plain XLA gather beats any standalone kernel.
    if not force_kernel and T < small_t_threshold:
        return jnp.take(w.astype(jnp.float32), jnp.clip(x, 0, c_in - 1), axis=0)

    # ---- packing geometry -------------------------------------------------
    if d_model < 128 and 128 % d_model == 0:
        P = 128 // d_model          # tokens packed per 128-wide output row
        d_pad = d_model
    else:
        P = 1
        d_pad = _round_up(d_model, 128)   # keep stores full-lane even if d_model % 128 != 0
    D = P * d_pad                   # multiple of 128
    K = P * c_in                    # one-hot contraction dim

    w_pad = w.astype(jnp.float32)
    if d_pad != d_model:
        w_pad = jnp.pad(w_pad, ((0, 0), (0, d_pad - d_model)))

    # Block-diagonal packed table: W_bd[p*c_in + k, p*d_pad + j] = w[k, j]
    eye_p = jnp.eye(P, dtype=jnp.float32)
    w_bd = (eye_p[:, None, :, None] * w_pad[None, :, None, :]).reshape(K, D)
    # Lane-group expander (E[p, j] = 1 iff j // c_in == p) and per-lane row id.
    e_mat = jnp.repeat(eye_p, c_in, axis=1)                                    # (P, K)
    kiota = jnp.tile(jnp.arange(c_in, dtype=jnp.float32), P)[None, :]          # (1, K)

    # ---- token-row tiling ---------------------------------------------------
    R = -(-T // P)                                    # packed rows needed
    TB = min(rows_per_tile, _round_up(R, 8))
    # VMEM budget: double-buffered out block (TB*D*4) + idx block padded to 128 lanes.
    vmem_budget = 24 * 1024 * 1024
    max_tb = max(8, (vmem_budget // (8 * (D + 128))) // 8 * 8)
    TB = max(8, min(TB, max_tb))
    # Keep >= 2 grid steps when there is enough work (2-TC sharding on v7x).
    if -(-R // TB) < 2 and R >= 16:
        TB = max(8, _round_up(-(-R // 2), 8))
    R_pad = _round_up(R, TB)
    T_pad = R_pad * P

    idx = x.reshape(T).astype(jnp.int32)
    if T_pad != T:
        idx = jnp.pad(idx, (0, T_pad - T))            # padded tokens -> index 0 (sliced off)
    idx = idx.reshape(R_pad, P)

    grid = (R_pad // TB,)
    kernel = functools.partial(_fixed_embedding_kernel, c_in=c_in, p_pack=P)

    flops = 2 * R_pad * K * (P + D)                   # expander matmul + one-hot matmul
    bytes_accessed = 4 * (R_pad * D + R_pad * P + K * D + P * K + K)

    out_packed = pl.pallas_call(
        kernel,
        out_shape=jax.ShapeDtypeStruct((R_pad, D), jnp.float32),
        grid=grid,
        in_specs=[
            pl.BlockSpec((TB, P), lambda i: (i, 0)),      # token blocks, pipelined DMA
            pl.BlockSpec((P, K), lambda i: (0, 0)),       # expander, VMEM resident
            pl.BlockSpec((1, K), lambda i: (0, 0)),       # lane row-id, VMEM resident
            pl.BlockSpec((K, D), lambda i: (0, 0)),       # packed table, VMEM resident
        ],
        out_specs=pl.BlockSpec((TB, D), lambda i: (i, 0)),  # lane-dense write-back
        compiler_params=pltpu.CompilerParams(
            dimension_semantics=("parallel",),
            vmem_limit_bytes=32 * 1024 * 1024,
        ),
        cost_estimate=pl.CostEstimate(
            flops=flops, transcendentals=0, bytes_accessed=bytes_accessed),
    )(idx, e_mat, kiota, w_bd)

    # Packed (R_pad, D) is identical row-major memory to (R_pad*P, d_pad): free reshape.
    out_flat = out_packed.reshape(R_pad * P, d_pad)[:T, :d_model]
    return out_flat.reshape(B, L, d_model)


if __name__ == "__main__":
    # Small shapes consistent with the module: temporal vocab c_in, hidden d_model.
    c_in, d_model = 24, 32
    B, L = 2, 8

    key = jax.random.PRNGKey(0)
    x = jax.random.randint(key, (B, L), 0, c_in, dtype=jnp.int32)
    w = make_fixed_embedding_table(c_in, d_model)

    # Reference: plain gather, same as nn.Embedding lookup of the frozen table.
    ref = jnp.take(w, x, axis=0)

    # Exercise the Pallas kernel path explicitly (small-T fast path bypassed).
    out = fixed_embedding(x, w, force_kernel=True)
    out = jax.block_until_ready(out)
    assert out.shape == (B, L, d_model)
    assert out.dtype == jnp.float32
    assert jnp.allclose(out, ref, atol=1e-6, rtol=1e-6)

    # Dispatcher fast path (what real callers with tiny T get) must agree too.
    out_fast = jax.block_until_ready(fixed_embedding(x, w))
    assert jnp.allclose(out_fast, ref, atol=1e-6, rtol=1e-6)

    print("KERNEL_OK")
</pallas_src>

<mosaic_0001>
module attributes {stable_mosaic.version = 11 : i64} {
  func.func @_fixed_embedding_kernel(%arg0: i32, %arg1: memref<8x4xi32, #tpu.memory_space<vmem>>, %arg2: memref<4x96xf32, #tpu.memory_space<vmem>>, %arg3: memref<1x96xf32, #tpu.memory_space<vmem>>, %arg4: memref<96x128xf32, #tpu.memory_space<vmem>>, %arg5: memref<8x128xf32, #tpu.memory_space<vmem>>) attributes {dimension_semantics = [#tpu.dimension_semantics<parallel>], iteration_bounds = array<i64: 1>, scalar_prefetch = 0 : i64, scratch_operands = 0 : i64, tpu.core_type = #tpu.core_type<tc>, window_params = [{transform_indices = @transform_0, window_bounds = array<i64: 8, 4>}, {pipeline_mode = #tpu.pipeline_mode<synchronous>, transform_indices = @transform_1, window_bounds = array<i64: 4, 96>}, {pipeline_mode = #tpu.pipeline_mode<synchronous>, transform_indices = @transform_2, window_bounds = array<i64: 1, 96>}, {pipeline_mode = #tpu.pipeline_mode<synchronous>, transform_indices = @transform_3, window_bounds = array<i64: 96, 128>}, {transform_indices = @transform_4, window_bounds = array<i64: 8, 128>}]} {
    %c0 = arith.constant 0 : index
    %c0_0 = arith.constant 0 : index
    %0 = vector.load %arg1[%c0, %c0_0] : memref<8x4xi32, #tpu.memory_space<vmem>>, vector<8x4xi32>
    %c0_i32 = arith.constant 0 : i32
    %c23_i32 = arith.constant 23 : i32
    %1 = vector.broadcast %c0_i32 : i32 to vector<8x4xi32>
    %2 = arith.maxsi %1, %0 : vector<8x4xi32>
    %3 = vector.broadcast %c23_i32 : i32 to vector<8x4xi32>
    %4 = arith.minsi %3, %2 : vector<8x4xi32>
    %5 = arith.sitofp %4 : vector<8x4xi32> to vector<8x4xf32>
    %c0_1 = arith.constant 0 : index
    %c0_2 = arith.constant 0 : index
    %6 = vector.load %arg2[%c0_1, %c0_2] : memref<4x96xf32, #tpu.memory_space<vmem>>, vector<4x96xf32>
    %cst = arith.constant dense<0.000000e+00> : vector<8x96xf32>
    %7 = tpu.matmul %5, %6, %cst {dimension_numbers = #tpu.dot_dimension_numbers<[1], [0], [0], [1], [0, 0, 1, 1], [], []>} : vector<8x4xf32>, vector<4x96xf32>, vector<8x96xf32> -> vector<8x96xf32>
    %c0_3 = arith.constant 0 : index
    %c0_4 = arith.constant 0 : index
    %8 = vector.load %arg3[%c0_3, %c0_4] : memref<1x96xf32, #tpu.memory_space<vmem>>, vector<1x96xf32>
    %9 = vector.broadcast %8 : vector<1x96xf32> to vector<8x96xf32>
    %10 = arith.cmpf oeq, %7, %9 : vector<8x96xf32>
    %11 = arith.extui %10 : vector<8x96xi1> to vector<8x96xi32>
    %12 = arith.sitofp %11 : vector<8x96xi32> to vector<8x96xf32>
    %c0_5 = arith.constant 0 : index
    %c0_6 = arith.constant 0 : index
    %13 = vector.load %arg4[%c0_5, %c0_6] : memref<96x128xf32, #tpu.memory_space<vmem>>, vector<96x128xf32>
    %cst_7 = arith.constant dense<0.000000e+00> : vector<8x128xf32>
    %14 = tpu.matmul %12, %13, %cst_7 {dimension_numbers = #tpu.dot_dimension_numbers<[1], [0], [0], [1], [0, 0, 1, 1], [], []>} : vector<8x96xf32>, vector<96x128xf32>, vector<8x128xf32> -> vector<8x128xf32>
    %c0_8 = arith.constant 0 : index
    %c0_9 = arith.constant 0 : index
    %15 = vector.load %arg5[%c0_8, %c0_9] : memref<8x128xf32, #tpu.memory_space<vmem>>, vector<8x128xf32>
    tpu.vector_store %arg5[%c0_8, %c0_9], %14 {strides = array<i32>} : memref<8x128xf32, #tpu.memory_space<vmem>>, vector<8x128xf32>,
    return
  }
  func.func @transform_0(%arg0: i32) -> (i32, i32) {
    %c0_i32 = arith.constant 0 : i32
    %c0_i32_0 = arith.constant 0 : i32
    return %arg0, %c0_i32 : i32, i32
  }
  func.func @transform_1(%arg0: i32) -> (i32, i32) {
    %c0_i32 = arith.constant 0 : i32
    %c0_i32_0 = arith.constant 0 : i32
    %c0_i32_1 = arith.constant 0 : i32
    return %c0_i32, %c0_i32_0 : i32, i32
  }
  func.func @transform_2(%arg0: i32) -> (i32, i32) {
    %c0_i32 = arith.constant 0 : i32
    %c0_i32_0 = arith.constant 0 : i32
    %c0_i32_1 = arith.constant 0 : i32
    return %c0_i32, %c0_i32_0 : i32, i32
  }
  func.func @transform_3(%arg0: i32) -> (i32, i32) {
    %c0_i32 = arith.constant 0 : i32
    %c0_i32_0 = arith.constant 0 : i32
    %c0_i32_1 = arith.constant 0 : i32
    return %c0_i32, %c0_i32_0 : i32, i32
  }
  func.func @transform_4(%arg0: i32) -> (i32, i32) {
    %c0_i32 = arith.constant 0 : i32
    %c0_i32_0 = arith.constant 0 : i32
    return %arg0, %c0_i32 : i32, i32
  }
}

</mosaic_0001>

<llo_original>
// kernel: tpu_custom_call.1
$region0: #{tpu_custom_call.1}
  #allocation0 [shape = 'u32[]', space=smem, size = 0x4, offset = 0x4, fixed_abs, tag = 'smem constant byte address 0x4 - core index']
  #allocation1 [shape = 'u32[144,128]{1,0:T(1,128)}', space=vmem, size = 0x12000, scoped, tag = 'internal scratch']
  %s0 = inlined_call_operand.vmem [shape: s32[8,4], index: 0, kind: input, shape index: {}]
  %s1 = inlined_call_operand.vmem [shape: f32[4,96], index: 1, kind: input, shape index: {}]
  %s2 = inlined_call_operand.vmem [shape: f32[1,96], index: 2, kind: input, shape index: {}]
  %s3 = inlined_call_operand.hbm [shape: f32[96,128], index: 3, kind: input, shape index: {}]
  %s4 = inlined_call_operand.hbm [shape: f32[8,128], index: 4, kind: output, shape index: {}]
  %s5 = sld [smem:[#allocation0]]
  $region30: #{tpu_custom_call.1} parent=0
    _
  %s7 = ssub.s32 1, %s5
  %s8 = scalar_select 0, %s7, %s5
  $region1: #{tpu_custom_call.1} parent=0
    #allocation2 [shape = 'u8[49152]{0}', space=vmem, size = 0xc000, scoped, tag = 'input window, operand 3, single buffered']
    #allocation3 [shape = 's32[1]{0}', space=sflag, size = 0x4, scoped, tag = 'scoped memory for tpu_custom_call.1']
    #allocation4 [shape = 's32[1]{0}', space=sflag, size = 0x4, scoped, tag = 'scoped memory for tpu_custom_call.1']
    #allocation5 [shape = 'u8[4096]{0}', space=vmem, size = 0x1000, scoped, tag = 'output window, operand 0, single buffered']
    %9 = vsyncpa [#allocation3], 0
    %10 = vsyncpa [#allocation4], 0
    // Predicated region
    $region2: #{tpu_custom_call.1} parent=1 // pred_check
      _
    $region3: #{tpu_custom_call.1} parent=1 // pred_check_branch
      %12 = sbr.rel (0) target = $region5
    $region4: #{tpu_custom_call.1} parent=1 // pred_region
      _
    $region5: #{tpu_custom_call.1} parent=1 // pred_fallthru
      _
    // Predicated region
    $region6: #{tpu_custom_call.1} parent=1 // pred_check
      _
    $region7: #{tpu_custom_call.1} parent=1 // pred_check_branch
      %14 = sbr.rel (0) target = $region9
    $region8: #{tpu_custom_call.1} parent=1 // pred_region
      _
    $region9: #{tpu_custom_call.1} parent=1 // pred_fallthru
      _
    // Predicated region
    $region10: #{tpu_custom_call.1} parent=1 // pred_check
      _
    $region11: #{tpu_custom_call.1} parent=1 // pred_check_branch
      %16 = sbr.rel (0) target = $region13
    $region12: #{tpu_custom_call.1} parent=1 // pred_region
      _
    $region13: #{tpu_custom_call.1} parent=1 // pred_fallthru
      _
    // Predicated region
    $region14: #{tpu_custom_call.1} parent=1 // pred_check
      _
    $region15: #{tpu_custom_call.1} parent=1 // pred_check_branch
      %18 = sbr.rel (0) target = $region17
    $region16: #{tpu_custom_call.1} parent=1 // pred_region
      %s20 = ssub.s32 1536, 1536
      %21 = vsyncadd [#allocation3], %s20
      %s22 = sshll.u32 [#allocation2], 4
      %s23 = int_to_ptr.vmem [resolvable:$true] %s22
      %28 = dma.hbm_to_vmem [thread:$0]  %s3, 1536, %s23, [#allocation3], 128, 128, 8
    $region17: #{tpu_custom_call.1} parent=1 // pred_fallthru
      _
    // Predicated region
    $region18: #{tpu_custom_call.1} parent=1 // pred_check
      _
    $region19: #{tpu_custom_call.1} parent=1 // pred_check_branch
      %30 = sbr.rel (0) target = $region21
    $region20: #{tpu_custom_call.1} parent=1 // pred_region
      %31 = dma.done [#allocation3], 1536
    $region21: #{tpu_custom_call.1} parent=1 // pred_fallthru
      _
    %v32 = vld [vmem:[%s0] sm:$0xff]
    %vm33 = vcmp.gt.s32.totalorder %v32, 0
    %v34 = vsel %vm33, %v32, 0
    %vm35 = vcmp.lt.s32.totalorder %v34, 23
    %v36 = vsel %vm35, %v34, 23
    %v37 = vcvt.s32.f32 %v36
    %v38 = vld [vmem:[%s1] sm:$0xf]
    %vm39 = vcmask 31744
    %v41 = vsel %vm39, %v37, 0
    %vm43 = vcmask 1043456
    %v45 = vsel %vm43, %v38, 0
    %47 = vmatprep.subr.mxu0 0.0
    %48 = vmatpush1.msra.mxu0 %v45
    %49 = vmatprep.subr.mxu0 0.0
    %50 = vmatpush1.msra.mxu0 0.0
    %51 = vmatprep.subr.mxu0 0.0
    %52 = vmatpush1.msra.mxu0 0.0
    %53 = vmatprep.subr.mxu0 0.0
    %54 = vmatpush1.msra.mxu0 0.0
    %55 = vmatprep.subr.mxu0 0.0
    %56 = vmatpush1.msra.mxu0 0.0
    %57 = vmatprep.subr.mxu0 0.0
    %58 = vmatpush1.msra.mxu0 0.0
    %59 = vmatprep.subr.mxu0 0.0
    %60 = vmatpush1.msra.mxu0 0.0
    %61 = vmatprep.subr.mxu0 0.0
    %62 = vmatpush1.msra.mxu0 0.0
    %63 = vmatprep.subr.mxu0 0.0
    %64 = vmatpush1.msra.mxu0 0.0
    %65 = vmatprep.subr.mxu0 0.0
    %66 = vmatpush1.msra.mxu0 0.0
    %67 = vmatprep.subr.mxu0 0.0
    %68 = vmatpush1.msra.mxu0 0.0
    %69 = vmatprep.subr.mxu0 0.0
    %70 = vmatpush1.msra.mxu0 0.0
    %71 = vmatprep.subr.mxu0 0.0
    %72 = vmatpush1.msra.mxu0 0.0
    %73 = vmatprep.subr.mxu0 0.0
    %74 = vmatpush1.msra.mxu0 0.0
    %75 = vmatprep.subr.mxu0 0.0
    %76 = vmatpush1.msra.mxu0 0.0
    %77 = vmatprep.subr.mxu0 0.0
    %78 = vmatpush1.msra.mxu0 0.0
    %79 = vmatprep.subr.mxu0 0.0
    %80 = vmatpush1.msra.mxu0 0.0
    %81 = vmatprep.subr.mxu0 0.0
    %82 = vmatpush1.msra.mxu0 0.0
    %83 = vmatprep.subr.mxu0 0.0
    %84 = vmatpush1.msra.mxu0 0.0
    %85 = vmatprep.subr.mxu0 0.0
    %86 = vmatpush1.msra.mxu0 0.0
    %87 = vmatprep.subr.mxu0 0.0
    %88 = vmatpush1.msra.mxu0 0.0
    %89 = vmatprep.subr.mxu0 0.0
    %90 = vmatpush1.msra.mxu0 0.0
    %91 = vmatprep.subr.mxu0 0.0
    %92 = vmatpush1.msra.mxu0 0.0
    %93 = vmatprep.subr.mxu0 0.0
    %94 = vmatpush1.msra.mxu0 0.0
    %95 = vmatprep.subr.mxu0 0.0
    %96 = vmatpush1.msra.mxu0 0.0
    %97 = vmatprep.subr.mxu0 0.0
    %98 = vmatpush1.msra.mxu0 0.0
    %99 = vmatprep.subr.mxu0 0.0
    %100 = vmatpush1.msra.mxu0 0.0
    %101 = vmatprep.subr.mxu0 0.0
    %102 = vmatpush1.msra.mxu0 0.0
    %103 = vmatprep.subr.mxu0 0.0
    %104 = vmatpush1.msra.mxu0 0.0
    %105 = vmatprep.subr.mxu0 0.0
    %106 = vmatpush1.msra.mxu0 0.0
    %107 = vmatprep.subr.mxu0 0.0
    %108 = vmatpush1.msra.mxu0 0.0
    %109 = vmatprep.subr.mxu0 0.0
    %110 = vmatpush1.msra.mxu0 0.0
    %111 = vmatprep.mubr.f32.mxu0 0.0
    %112 = vmatmul.mubr.f32.gmra.mrb[0].mxu0 %v41
    %v113 = vpop.f32.mrb[0].mxu0
    %v114 = vadd.f32 0.0, %v113
    %v115 = vpop.f32.mrb[0].mxu0
    %116 = vdwg.mxu0
    %v117 = vld [vmem:[%s2] sm:$0x1]
    %v119 = vlaneseq
    %v120 = vshrl.u32 %v119, 7
    %v121 = vsub.s32 0, %v120
    %v122 = vrot.slane %v117, %v121
    %vm124 = vcmp.eq.f32.partialorder %v114, %v122
    %v125 = vsel %vm124, 1, 0
    %v126 = vcvt.s32.f32 %v125
    %v127 = vld [vmem:[#allocation2] sm:$0xff]
    %v128 = vld [vmem:[#allocation2 + $0x8] sm:$0xff]
    %v129 = vld [vmem:[#allocation2 + $0x10] sm:$0xff]
    %v130 = vld [vmem:[#allocation2 + $0x18] sm:$0xff]
    %v131 = vld [vmem:[#allocation2 + $0x20] sm:$0xff]
    %v132 = vld [vmem:[#allocation2 + $0x28] sm:$0xff]
    %v133 = vld [vmem:[#allocation2 + $0x30] sm:$0xff]
    %v134 = vld [vmem:[#allocation2 + $0x38] sm:$0xff]
    %v135 = vld [vmem:[#allocation2 + $0x40] sm:$0xff]
    %v136 = vld [vmem:[#allocation2 + $0x48] sm:$0xff]
    %v137 = vld [vmem:[#allocation2 + $0x50] sm:$0xff]
    %v138 = vld [vmem:[#allocation2 + $0x58] sm:$0xff]
    %vm139 = vcmask 785408
    %v141 = vsel %vm139, %v126, 0
    %143 = vmatprep.subr.mxu0 0.0
    %144 = vmatpush1.msra.mxu0 %v127
    %145 = vmatprep.subr.mxu0 0.0
    %146 = vmatpush1.msra.mxu0 %v128
    %147 = vmatprep.subr.mxu0 0.0
    %148 = vmatpush1.msra.mxu0 %v129
    %149 = vmatprep.subr.mxu0 0.0
    %150 = vmatpush1.msra.mxu0 %v130
    %151 = vmatprep.subr.mxu0 0.0
    %152 = vmatpush1.msra.mxu0 %v131
    %153 = vmatprep.subr.mxu0 0.0
    %154 = vmatpush1.msra.mxu0 %v132
    %155 = vmatprep.subr.mxu0 0.0
    %156 = vmatpush1.msra.mxu0 %v133
    %157 = vmatprep.subr.mxu0 0.0
    %158 = vmatpush1.msra.mxu0 %v134
    %159 = vmatprep.subr.mxu0 0.0
    %160 = vmatpush1.msra.mxu0 %v135
    %161 = vmatprep.subr.mxu0 0.0
    %162 = vmatpush1.msra.mxu0 %v136
    %163 = vmatprep.subr.mxu0 0.0
    %164 = vmatpush1.msra.mxu0 %v137
    %165 = vmatprep.subr.mxu0 0.0
    %166 = vmatpush1.msra.mxu0 %v138
    %167 = vmatprep.subr.mxu0 0.0
    %168 = vmatpush1.msra.mxu0 0.0
    %169 = vmatprep.subr.mxu0 0.0
    %170 = vmatpush1.msra.mxu0 0.0
    %171 = vmatprep.subr.mxu0 0.0
    %172 = vmatpush1.msra.mxu0 0.0
    %173 = vmatprep.subr.mxu0 0.0
    %174 = vmatpush1.msra.mxu0 0.0
    %175 = vmatprep.subr.mxu0 0.0
    %176 = vmatpush1.msra.mxu0 0.0
    %177 = vmatprep.subr.mxu0 0.0
    %178 = vmatpush1.msra.mxu0 0.0
    %179 = vmatprep.subr.mxu0 0.0
    %180 = vmatpush1.msra.mxu0 0.0
    %181 = vmatprep.subr.mxu0 0.0
    %182 = vmatpush1.msra.mxu0 0.0
    %183 = vmatprep.subr.mxu0 0.0
    %184 = vmatpush1.msra.mxu0 0.0
    %185 = vmatprep.subr.mxu0 0.0
    %186 = vmatpush1.msra.mxu0 0.0
    %187 = vmatprep.subr.mxu0 0.0
    %188 = vmatpush1.msra.mxu0 0.0
    %189 = vmatprep.subr.mxu0 0.0
    %190 = vmatpush1.msra.mxu0 0.0
    %191 = vmatprep.subr.mxu0 0.0
    %192 = vmatpush1.msra.mxu0 0.0
    %193 = vmatprep.subr.mxu0 0.0
    %194 = vmatpush1.msra.mxu0 0.0
    %195 = vmatprep.subr.mxu0 0.0
    %196 = vmatpush1.msra.mxu0 0.0
    %197 = vmatprep.subr.mxu0 0.0
    %198 = vmatpush1.msra.mxu0 0.0
    %199 = vmatprep.subr.mxu0 0.0
    %200 = vmatpush1.msra.mxu0 0.0
    %201 = vmatprep.subr.mxu0 0.0
    %202 = vmatpush1.msra.mxu0 0.0
    %203 = vmatprep.subr.mxu0 0.0
    %204 = vmatpush1.msra.mxu0 0.0
    %205 = vmatprep.subr.mxu0 0.0
    %206 = vmatpush1.msra.mxu0 0.0
    %207 = vmatprep.mubr.f32.mxu0 0.0
    %208 = vmatmul.mubr.f32.gmra.mrb[0].mxu0 %v141
    %v209 = vpop.f32.mrb[0].mxu0
    %v210 = vadd.f32 0.0, %v209
    %v211 = vpop.f32.mrb[0].mxu0
    %212 = vdwg.mxu0
    %213 = vst [vmem:[#allocation5] sm:$0xff] %v210
    // Predicated region
    $region22: #{tpu_custom_call.1} parent=1 // pred_check
      _
    $region23: #{tpu_custom_call.1} parent=1 // pred_check_branch
      %215 = sbr.rel (0) target = $region25
    $region24: #{tpu_custom_call.1} parent=1 // pred_region
      %s217 = ssub.s32 128, 128
      %218 = vsyncadd [#allocation4], %s217
      %s220 = sshll.u32 [#allocation5], 4
      %s221 = int_to_ptr.vmem [resolvable:$true] %s220
      %223 = dma.vmem_to_hbm [thread:$0]  %s221, 128, %s4, [#allocation4]
    $region25: #{tpu_custom_call.1} parent=1 // pred_fallthru
      _
    // Predicated region
    $region26: #{tpu_custom_call.1} parent=1 // pred_check
      _
    $region27: #{tpu_custom_call.1} parent=1 // pred_check_branch
      %225 = sbr.rel (0) target = $region29
    $region28: #{tpu_custom_call.1} parent=1 // pred_region
      %226 = dma.done [#allocation4], 128
    $region29: #{tpu_custom_call.1} parent=1 // pred_fallthru
      _
    %227 = vsyncpa [#allocation3], 1
    %228 = vsyncpa [#allocation4], 1

</llo_original>
